<compile_context>
chip_gen: v7x
topology: tpu7x:2x2x1
jax: 0.10.0
libtpu: 0.0.40
codegen_flags: <defaults>
</compile_context>

<pallas_src>
import jax
import jax.numpy as jnp
from jax.experimental import pallas as pl
from jax.experimental.pallas import tpu as pltpu

LANES = 128  # vreg lane width; last block dim multiple of 128 -> unmasked vst


def _mish_kernel(x_ref, o_ref):
    x = x_ref[...].astype(jnp.float32)
    # tanh(softplus(x)) = (z^2 - 1) / (z^2 + 1) with z = 1 + e^x
    #                   = e*(e + 2) / (e*(e + 2) + 2)      (cancellation-free)
    # Clamp the exp argument so e*(e+2) stays finite in f32; for x > 20 the
    # activation equals x to f32 precision, so pass x straight through.
    e = jnp.exp(jnp.minimum(x, 20.0))
    num = e * (e + 2.0)
    t = num / (num + 2.0)
    y = jnp.where(x > 20.0, x, x * t)
    o_ref[...] = y.astype(o_ref.dtype)


def _round_up(a, m):
    return (a + m - 1) // m * m


def _tile_rows_for_device():
    """Per-block row count (of 128 lanes) for this TPU generation."""
    try:
        kind = jax.devices()[0].device_kind.lower()
    except Exception:
        kind = ""
    # v5e (and older) default scoped VMEM is 16 MiB: stay at 2 MiB f32 blocks
    # (8 MiB double-buffered in+out).  v6e / v7x default is 32 MiB: 4 MiB
    # blocks halve the ~0.35 us per-grid-step overhead share with headroom.
    if any(v in kind for v in ("v2", "v3", "v4", "v5")):
        return 4096
    return 8192


def _pick_block_rows(rows, tile_rows):
    if rows <= 1024:          # <= 512 KiB f32: a single block is fine
        return rows
    # At least ~4 grid steps so DMAs overlap and both v7x TCs get work;
    # multiple of 8 keeps sublane tiling clean for partial blocks.
    return min(tile_rows, max(512, _round_up(pl.cdiv(rows, 4), 8)))


def mish(x):
    """Elementwise Mish: x * tanh(softplus(x)).  Any shape / float dtype."""
    orig_shape = x.shape
    orig_dtype = x.dtype
    n = x.size
    if n == 0:
        return x

    itemsize = jnp.dtype(orig_dtype).itemsize
    cost = pl.CostEstimate(
        flops=8 * n, transcendentals=n, bytes_accessed=2 * n * itemsize)
    cparams = pltpu.CompilerParams(dimension_semantics=("parallel",))
    tile_rows = _tile_rows_for_device()

    if n % LANES == 0:
        # Lane-aligned (the usual conv feature-map case): free reshape to a
        # lane-dense (rows, 128) view, zero extra HBM copies.
        rows = n // LANES
        tr = _pick_block_rows(rows, tile_rows)
        out = pl.pallas_call(
            _mish_kernel,
            out_shape=jax.ShapeDtypeStruct((rows, LANES), orig_dtype),
            grid=(pl.cdiv(rows, tr),),
            in_specs=[pl.BlockSpec((tr, LANES), lambda i: (i, 0))],
            out_specs=pl.BlockSpec((tr, LANES), lambda i: (i, 0)),
            compiler_params=cparams,
            cost_estimate=cost,
        )(x.reshape(rows, LANES))
        return out.reshape(orig_shape)

    # Non-lane-aligned: run directly on the flat 1-D array (no jnp.pad /
    # output-slice HBM round-trips); Pallas masks the ragged last block.
    blk = _pick_block_rows(pl.cdiv(n, LANES), tile_rows) * LANES
    if blk >= n:
        blk = n               # single full-array block
    out = pl.pallas_call(
        _mish_kernel,
        out_shape=jax.ShapeDtypeStruct((n,), orig_dtype),
        grid=(pl.cdiv(n, blk),),
        in_specs=[pl.BlockSpec((blk,), lambda i: (i,))],
        out_specs=pl.BlockSpec((blk,), lambda i: (i,)),
        compiler_params=cparams,
        cost_estimate=cost,
    )(x.reshape(-1))
    return out.reshape(orig_shape)


def _mish_ref(x):
    # Plain-JAX reference: x * tanh(softplus(x)) with stable softplus.
    return x * jnp.tanh(jnp.logaddexp(x, 0.0))


if __name__ == "__main__":
    key = jax.random.PRNGKey(0)

    # NCHW-style input consistent with typical conv sublayer usage (aligned).
    x = jax.random.normal(key, (2, 4, 16, 16), dtype=jnp.float32) * 3.0
    y = mish(x)
    jax.block_until_ready(y)
    y_ref = _mish_ref(x)
    assert y.shape == x.shape and y.dtype == x.dtype
    assert jnp.max(jnp.abs(y - y_ref)) < 1e-4

    # Non-lane-aligned path (flat size 210, not a multiple of 128).
    x2 = jax.random.normal(jax.random.PRNGKey(1), (2, 3, 7, 5),
                           dtype=jnp.float32) * 3.0
    y2 = mish(x2)
    jax.block_until_ready(y2)
    y2_ref = _mish_ref(x2)
    assert y2.shape == x2.shape and y2.dtype == x2.dtype
    assert jnp.max(jnp.abs(y2 - y2_ref)) < 1e-4

    # Tail / extreme-value accuracy: exercises the cancellation-free form in
    # the negative tail and the x > 20 passthrough (relative + absolute).
    x3 = jnp.linspace(-30.0, 30.0, 256, dtype=jnp.float32).reshape(2, 128)
    y3 = mish(x3)
    jax.block_until_ready(y3)
    y3_ref = _mish_ref(x3)
    assert bool(jnp.all(jnp.abs(y3 - y3_ref) <= 1e-5 + 1e-3 * jnp.abs(y3_ref)))

    print("KERNEL_OK")
</pallas_src>

<mosaic_0001>
module attributes {stable_mosaic.version = 11 : i64} {
  func.func @_mish_kernel(%arg0: i32, %arg1: memref<16x128xf32, #tpu.memory_space<vmem>>, %arg2: memref<16x128xf32, #tpu.memory_space<vmem>>) attributes {dimension_semantics = [#tpu.dimension_semantics<parallel>], iteration_bounds = array<i64: 1>, scalar_prefetch = 0 : i64, scratch_operands = 0 : i64, tpu.core_type = #tpu.core_type<tc>, window_params = [{transform_indices = @transform_0, window_bounds = array<i64: 16, 128>}, {transform_indices = @transform_1, window_bounds = array<i64: 16, 128>}]} {
    %c0 = arith.constant 0 : index
    %c0_0 = arith.constant 0 : index
    %0 = vector.load %arg1[%c0, %c0_0] : memref<16x128xf32, #tpu.memory_space<vmem>>, vector<16x128xf32>
    %cst = arith.constant 2.000000e+01 : f32
    %1 = vector.broadcast %cst : f32 to vector<16x128xf32>
    %2 = arith.minimumf %0, %1 : vector<16x128xf32>
    %3 = math.exp %2 : vector<16x128xf32>
    %cst_1 = arith.constant 2.000000e+00 : f32
    %4 = vector.broadcast %cst_1 : f32 to vector<16x128xf32>
    %5 = arith.addf %3, %4 : vector<16x128xf32>
    %6 = arith.mulf %3, %5 : vector<16x128xf32>
    %cst_2 = arith.constant 2.000000e+00 : f32
    %7 = vector.broadcast %cst_2 : f32 to vector<16x128xf32>
    %8 = arith.addf %6, %7 : vector<16x128xf32>
    %9 = arith.divf %6, %8 : vector<16x128xf32>
    %cst_3 = arith.constant 2.000000e+01 : f32
    %10 = vector.broadcast %cst_3 : f32 to vector<16x128xf32>
    %11 = arith.cmpf ogt, %0, %10 : vector<16x128xf32>
    %12 = arith.mulf %0, %9 : vector<16x128xf32>
    %13 = arith.select %11, %0, %12 : vector<16x128xi1>, vector<16x128xf32>
    %c0_4 = arith.constant 0 : index
    %c0_5 = arith.constant 0 : index
    %14 = vector.load %arg2[%c0_4, %c0_5] : memref<16x128xf32, #tpu.memory_space<vmem>>, vector<16x128xf32>
    tpu.vector_store %arg2[%c0_4, %c0_5], %13 {strides = array<i32>} : memref<16x128xf32, #tpu.memory_space<vmem>>, vector<16x128xf32>,
    return
  }
  func.func @transform_0(%arg0: i32) -> (i32, i32) {
    %c0_i32 = arith.constant 0 : i32
    %c0_i32_0 = arith.constant 0 : i32
    return %arg0, %c0_i32 : i32, i32
  }
  func.func @transform_1(%arg0: i32) -> (i32, i32) {
    %c0_i32 = arith.constant 0 : i32
    %c0_i32_0 = arith.constant 0 : i32
    return %arg0, %c0_i32 : i32, i32
  }
}

</mosaic_0001>

<llo_original>
// kernel: tpu_custom_call.1
$region0: #{tpu_custom_call.1}
  #allocation0 [shape = 'u32[]', space=smem, size = 0x4, offset = 0x4, fixed_abs, tag = 'smem constant byte address 0x4 - core index']
  #allocation1 [shape = 'u32[144,128]{1,0:T(1,128)}', space=vmem, size = 0x12000, scoped, tag = 'internal scratch']
  %s0 = inlined_call_operand.hbm [shape: f32[16,128], index: 0, kind: input, shape index: {}]
  %s1 = inlined_call_operand.hbm [shape: f32[16,128], index: 1, kind: output, shape index: {}]
  %s2 = sld [smem:[#allocation0]]
  $region18: #{tpu_custom_call.1} parent=0
    _
  %s4 = ssub.s32 1, %s2
  %s5 = scalar_select 0, %s4, %s2
  $region1: #{tpu_custom_call.1} parent=0
    #allocation2 [shape = 'u8[8192]{0}', space=vmem, size = 0x2000, scoped, tag = 'input window, operand 0, single buffered']
    #allocation3 [shape = 's32[1]{0}', space=sflag, size = 0x4, scoped, tag = 'scoped memory for tpu_custom_call.1']
    #allocation4 [shape = 's32[1]{0}', space=sflag, size = 0x4, scoped, tag = 'scoped memory for tpu_custom_call.1']
    #allocation5 [shape = 'u8[8192]{0}', space=vmem, size = 0x2000, scoped, tag = 'output window, operand 0, single buffered']
    %6 = vsyncpa [#allocation3], 0
    %7 = vsyncpa [#allocation4], 0
    // Predicated region
    $region2: #{tpu_custom_call.1} parent=1 // pred_check
      _
    $region3: #{tpu_custom_call.1} parent=1 // pred_check_branch
      %9 = sbr.rel (0) target = $region5
    $region4: #{tpu_custom_call.1} parent=1 // pred_region
      %s11 = ssub.s32 256, 256
      %12 = vsyncadd [#allocation3], %s11
      %s13 = sshll.u32 [#allocation2], 4
      %s14 = int_to_ptr.vmem [resolvable:$true] %s13
      %19 = dma.hbm_to_vmem [thread:$0]  %s0, 256, %s14, [#allocation3], 128, 128, 8
    $region5: #{tpu_custom_call.1} parent=1 // pred_fallthru
      _
    // Predicated region
    $region6: #{tpu_custom_call.1} parent=1 // pred_check
      _
    $region7: #{tpu_custom_call.1} parent=1 // pred_check_branch
      %21 = sbr.rel (0) target = $region9
    $region8: #{tpu_custom_call.1} parent=1 // pred_region
      %22 = dma.done [#allocation3], 256
    $region9: #{tpu_custom_call.1} parent=1 // pred_fallthru
      _
    %v23 = vld [vmem:[#allocation2] sm:$0xff]
    %v24 = vld [vmem:[#allocation2 + $0x8] sm:$0xff]
    %v25 = vmin.f32 %v23, 20.0
    %v26 = vmin.f32 %v24, 20.0
    %v27 = vmul.f32 %v25, 1.442695
    %v28 = vpow.pop %v27
    %v29 = vmul.f32 %v26, 1.442695
    %v30 = vpow.pop %v29
    %v31 = vadd.f32 %v28, 2.0
    %v32 = vadd.f32 %v30, 2.0
    %v33 = vmul.f32 %v28, %v31
    %v34 = vmul.f32 %v30, %v32
    %v35 = vadd.f32 %v33, 2.0
    %v36 = vadd.f32 %v34, 2.0
    %v37 = vrcp.pop %v35
    %v38 = vmul.f32 %v33, %v37
    %v39 = vrcp.pop %v36
    %v40 = vmul.f32 %v34, %v39
    %vm41 = vcmp.gt.f32.partialorder %v23, 20.0
    %vm42 = vcmp.gt.f32.partialorder %v24, 20.0
    %v43 = vmul.f32 %v23, %v38
    %v44 = vmul.f32 %v24, %v40
    %v45 = vsel %vm41, %v23, %v43
    %v46 = vsel %vm42, %v24, %v44
    %47 = vst [vmem:[#allocation5] sm:$0xff] %v45
    %48 = vst [vmem:[#allocation5 + $0x8] sm:$0xff] %v46
    // Predicated region
    $region10: #{tpu_custom_call.1} parent=1 // pred_check
      _
    $region11: #{tpu_custom_call.1} parent=1 // pred_check_branch
      %50 = sbr.rel (0) target = $region13
    $region12: #{tpu_custom_call.1} parent=1 // pred_region
      %s52 = ssub.s32 256, 256
      %53 = vsyncadd [#allocation4], %s52
      %s54 = sshll.u32 [#allocation5], 4
      %s55 = int_to_ptr.vmem [resolvable:$true] %s54
      %60 = dma.vmem_to_hbm [thread:$0]  %s55, 256, %s1, [#allocation4], 128, 128, 8
    $region13: #{tpu_custom_call.1} parent=1 // pred_fallthru
      _
    // Predicated region
    $region14: #{tpu_custom_call.1} parent=1 // pred_check
      _
    $region15: #{tpu_custom_call.1} parent=1 // pred_check_branch
      %62 = sbr.rel (0) target = $region17
    $region16: #{tpu_custom_call.1} parent=1 // pred_region
      %63 = dma.done [#allocation4], 256
    $region17: #{tpu_custom_call.1} parent=1 // pred_fallthru
      _
    %64 = vsyncpa [#allocation3], 1
    %65 = vsyncpa [#allocation4], 1

</llo_original>
